<compile_context>
chip_gen: v5e
topology: v5e:2x2
jax: 0.10.0
libtpu: 0.0.40
codegen_flags: <defaults>
</compile_context>

<pallas_src>
import functools

import jax
import jax.numpy as jnp
from jax.experimental import pallas as pl
from jax.experimental.pallas import tpu as pltpu

LANE = 128


def _round_up(n, m):
    return ((n + m - 1) // m) * m


def _pad2d(x, rows, cols):
    r, c = x.shape
    return jnp.pad(x, ((0, rows - r), (0, cols - c)))


def _vmem_capacity_bytes():
    try:
        return int(pltpu.get_tpu_info().vmem_capacity_bytes)
    except Exception:
        return 64 * 1024 * 1024  # conservative (v7x per-TC VMEM)


def _vmem_limit(footprint, cap):
    # At least 16 MiB (cheap), at most cap - 8 MiB headroom for co-scheduled fusions.
    return int(min(max(footprint, 16 << 20), max(cap - (8 << 20), 16 << 20)))


def _fused_footprint(n_pad, f_pad, h_pad, num_layers):
    """Conservative VMEM bytes for the fully-fused whole-model kernel."""
    a_b = n_pad * n_pad * 2
    x_b = n_pad * f_pad * 2
    w_b = f_pad * h_pad * 2 + (num_layers - 1) * h_pad * h_pad * 2
    vec_b = (num_layers + 1) * 8 * h_pad * 4          # scale + per-layer shift (sublane-padded)
    out_b = n_pad * h_pad * 2
    act_b = n_pad * h_pad * 2                          # scratch activation
    temps = 4 * n_pad * max(h_pad, f_pad) * 4          # f32 intermediates inside the body
    # Inputs/outputs may be double-buffered by the pipeline even at grid=(1,).
    return 2 * (a_b + x_b + w_b + vec_b + out_b) + act_b + temps + (2 << 20)


def _pick_row_tile(n_pad, f_pad, h_pad, cap):
    """Row-tile size for the tiled (large-graph) path, sized for this chip's VMEM."""
    budget = int(cap * 0.6)
    k_max = max(n_pad, f_pad)
    resident = n_pad * h_pad * 2 + 2 * f_pad * h_pad * 2   # resident XW + double-buffered W
    chosen, need = 8, None
    for tm in (1024, 512, 256, 128, 64, 32, 16, 8):
        if n_pad % tm:
            continue
        cost = (resident
                + 2 * tm * k_max * 2      # double-buffered A / X row tiles (bf16)
                + 2 * tm * h_pad * 2      # double-buffered output tiles (bf16)
                + 2 * tm * h_pad * 4      # f32 epilogue temporaries
                + (2 << 20))
        if need is None:
            chosen, need = tm, cost       # fallback = smallest examined
        if cost <= budget:
            return tm, cost
        chosen, need = tm, cost
    return chosen, need


# ---------------------------------------------------------------------------
# Fully-fused whole-model kernel (small/medium graphs): everything in VMEM,
# one grid step, one HBM writeback.
# ---------------------------------------------------------------------------
def _make_fused_kernel(num_layers):
    def kernel(*refs):
        a_ref, x_ref, scale_ref = refs[0], refs[1], refs[2]
        layer_refs = refs[3:3 + 2 * num_layers]
        out_ref = refs[3 + 2 * num_layers]
        act_ref = refs[4 + 2 * num_layers]   # VMEM scratch for inter-layer activation

        a = a_ref[...]
        scale = scale_ref[...]
        for l in range(num_layers):
            w = layer_refs[2 * l][...]
            shift = layer_refs[2 * l + 1][...]
            src = x_ref[...] if l == 0 else act_ref[...]
            # Feature transform (MXU, f32 accumulation), then aggregation over A_hat.
            xw = jnp.dot(src, w, preferred_element_type=jnp.float32).astype(jnp.bfloat16)
            h = jnp.dot(a, xw, preferred_element_type=jnp.float32)
            # Folded BatchNorm1d (running stats) + conv bias + ReLU (f32 VPU epilogue).
            y = jnp.maximum(h * scale + shift, 0.0)
            if l == num_layers - 1:
                out_ref[...] = y.astype(out_ref.dtype)
            else:
                # Padded rows become relu(shift) != 0 here; this is safe because A_hat's
                # padded columns are zero, so they never contribute to valid rows.
                act_ref[...] = y.astype(act_ref.dtype)
    return kernel


def gcn_fused_forward(a_p, x_p, scale_p, layer_args, *, n_pad, f_pad, h_pad,
                      num_layers, vmem_limit):
    in_specs = [
        pl.BlockSpec((n_pad, n_pad), lambda i: (0, 0)),   # A_hat
        pl.BlockSpec((n_pad, f_pad), lambda i: (0, 0)),   # X
        pl.BlockSpec((1, h_pad), lambda i: (0, 0)),       # BN scale
    ]
    cur_f = f_pad
    for _ in range(num_layers):
        in_specs.append(pl.BlockSpec((cur_f, h_pad), lambda i: (0, 0)))  # W_l
        in_specs.append(pl.BlockSpec((1, h_pad), lambda i: (0, 0)))      # shift_l
        cur_f = h_pad

    return pl.pallas_call(
        _make_fused_kernel(num_layers),
        out_shape=jax.ShapeDtypeStruct((n_pad, h_pad), jnp.bfloat16),
        grid_spec=pltpu.PrefetchScalarGridSpec(
            num_scalar_prefetch=0,
            grid=(1,),
            in_specs=in_specs,
            out_specs=pl.BlockSpec((n_pad, h_pad), lambda i: (0, 0)),
            scratch_shapes=[pltpu.VMEM((n_pad, h_pad), jnp.bfloat16)],
        ),
        compiler_params=pltpu.CompilerParams(
            dimension_semantics=("arbitrary",),
            vmem_limit_bytes=vmem_limit,
        ),
    )(a_p, x_p, scale_p, *layer_args)


# ---------------------------------------------------------------------------
# Large-graph path, kernel 1: per-layer feature transform XW = X @ W (row-tiled).
# ---------------------------------------------------------------------------
def feature_transform_kernel(x_ref, w_ref, o_ref):
    o_ref[...] = jnp.dot(
        x_ref[...], w_ref[...], preferred_element_type=jnp.float32
    ).astype(o_ref.dtype)


def feature_transform(x_bf16, w_bf16, *, tm, vmem_limit):
    n_pad, f_pad = x_bf16.shape
    h_pad = w_bf16.shape[1]
    return pl.pallas_call(
        feature_transform_kernel,
        out_shape=jax.ShapeDtypeStruct((n_pad, h_pad), jnp.bfloat16),
        grid_spec=pltpu.PrefetchScalarGridSpec(
            num_scalar_prefetch=0,
            grid=(n_pad // tm,),
            in_specs=[
                pl.BlockSpec((tm, f_pad), lambda i: (i, 0)),
                pl.BlockSpec((f_pad, h_pad), lambda i: (0, 0)),
            ],
            out_specs=pl.BlockSpec((tm, h_pad), lambda i: (i, 0)),
        ),
        compiler_params=pltpu.CompilerParams(
            dimension_semantics=("parallel",),
            vmem_limit_bytes=vmem_limit,
        ),
    )(x_bf16, w_bf16)


# ---------------------------------------------------------------------------
# Large-graph path, kernel 2: H = relu((A_hat @ XW) * scale + shift)
# XW is fully resident in VMEM (constant-index full block) -> no reduction grid
# axis, no accumulator scratch, single contiguous row-tile matmul per step.
# ---------------------------------------------------------------------------
def aggregate_bn_relu_kernel(a_ref, xw_ref, scale_ref, shift_ref, o_ref):
    h = jnp.dot(a_ref[...], xw_ref[...], preferred_element_type=jnp.float32)
    o_ref[...] = jnp.maximum(h * scale_ref[...] + shift_ref[...], 0.0).astype(o_ref.dtype)


def aggregate_bn_relu(a_bf16, xw_bf16, scale, shift, *, tm, vmem_limit):
    n_pad = a_bf16.shape[0]
    h_pad = xw_bf16.shape[1]
    return pl.pallas_call(
        aggregate_bn_relu_kernel,
        out_shape=jax.ShapeDtypeStruct((n_pad, h_pad), jnp.bfloat16),
        grid_spec=pltpu.PrefetchScalarGridSpec(
            num_scalar_prefetch=0,
            grid=(n_pad // tm,),
            in_specs=[
                pl.BlockSpec((tm, n_pad), lambda i: (i, 0)),       # A row tile (contiguous rows)
                pl.BlockSpec((n_pad, h_pad), lambda i: (0, 0)),    # XW resident in VMEM
                pl.BlockSpec((1, h_pad), lambda i: (0, 0)),
                pl.BlockSpec((1, h_pad), lambda i: (0, 0)),
            ],
            out_specs=pl.BlockSpec((tm, h_pad), lambda i: (i, 0)),
        ),
        compiler_params=pltpu.CompilerParams(
            dimension_semantics=("parallel",),   # row tiles shard across v7x's 2 TensorCores
            vmem_limit_bytes=vmem_limit,
        ),
    )(a_bf16, xw_bf16, scale, shift)


# ---------------------------------------------------------------------------
# Plain-JAX glue: dense symmetrically-normalized adjacency (PyG gcn_norm,
# DIRECTED edge_index, add_remaining_self_loops semantics).
# ---------------------------------------------------------------------------
def normalized_dense_adj(edge_index, num_nodes):
    src, dst = edge_index[0], edge_index[1]
    a = jnp.zeros((num_nodes, num_nodes), jnp.float32)
    a = a.at[dst, src].add(1.0)                                   # message j -> i lands in row i
    diag = jnp.diagonal(a)
    a = a + jnp.diag(jnp.where(diag > 0, 0.0, 1.0))               # add *remaining* self loops
    deg = a.sum(axis=1)                                           # deg over targets (incl. self loops)
    d_inv_sqrt = jax.lax.rsqrt(deg)
    return a * d_inv_sqrt[:, None] * d_inv_sqrt[None, :]


@functools.partial(jax.jit, static_argnames=("num_nodes",))
def gcn_model_forward(x, edge_index, params, num_nodes):
    """GCNMODEL.forward: for each layer: GCNConv -> BatchNorm1d -> ReLU -> Dropout(id)."""
    n, f_in = x.shape
    h = params["layers"][0]["w"].shape[1]
    num_layers = len(params["layers"])

    f_pad = _round_up(max(f_in, LANE), LANE)
    h_pad = _round_up(max(h, LANE), LANE)
    cap = _vmem_capacity_bytes()

    n_pad_small = _round_up(max(n, LANE), LANE)
    fused_bytes = _fused_footprint(n_pad_small, f_pad, h_pad, num_layers)
    use_fused = fused_bytes <= int(0.6 * cap)
    # Tiled path pads N to a multiple of 512 so the DMA-efficient row tiles are usable.
    n_pad = n_pad_small if use_fused else _round_up(max(n, 512), 512)

    # Shared BatchNorm1d (eval mode) folded into scale/shift; per-layer conv bias folded in.
    inv_std = jax.lax.rsqrt(params["bn_var"] + 1e-5)
    bn_scale = params["bn_gamma"] * inv_std
    scale_p = jnp.pad(bn_scale, (0, h_pad - h)).reshape(1, h_pad).astype(jnp.float32)

    def shift_for(layer):
        s = params["bn_beta"] + (layer["b"] - params["bn_mean"]) * bn_scale
        return jnp.pad(s, (0, h_pad - h)).reshape(1, h_pad).astype(jnp.float32)

    # Dense normalized adjacency, zero-padded and cast to bf16 once (f32 MXU accumulation
    # keeps it numerically safe; halves the dominant O(N^2) HBM stream).
    a_hat = normalized_dense_adj(edge_index, num_nodes)
    a_p = _pad2d(a_hat, n_pad, n_pad).astype(jnp.bfloat16)
    x_p = _pad2d(x, n_pad, f_pad).astype(jnp.bfloat16)

    if use_fused:
        layer_args = []
        cur_f = f_pad
        for layer in params["layers"]:
            layer_args.append(_pad2d(layer["w"], cur_f, h_pad).astype(jnp.bfloat16))
            layer_args.append(shift_for(layer))
            cur_f = h_pad
        out_p = gcn_fused_forward(
            a_p, x_p, scale_p, layer_args,
            n_pad=n_pad, f_pad=f_pad, h_pad=h_pad, num_layers=num_layers,
            vmem_limit=_vmem_limit(fused_bytes, cap),
        )
    else:
        tm, tile_bytes = _pick_row_tile(n_pad, f_pad, h_pad, cap)
        vlim = _vmem_limit(tile_bytes, cap)
        act = x_p
        cur_f = f_pad
        for layer in params["layers"]:
            w_p = _pad2d(layer["w"], cur_f, h_pad).astype(jnp.bfloat16)
            xw = feature_transform(act, w_p, tm=tm, vmem_limit=vlim)      # X @ W once per layer
            act = aggregate_bn_relu(a_p, xw, scale_p, shift_for(layer), tm=tm, vmem_limit=vlim)
            cur_f = h_pad
        out_p = act
        # Dropout: identity in eval mode.

    out = out_p[:n, :h].astype(jnp.float32)
    return out, out


def init_params(key, in_features, hidden, num_layers):
    params = {"layers": []}
    fan_in = in_features
    for _ in range(num_layers):
        key, kw = jax.random.split(key)
        w = jax.random.normal(kw, (fan_in, hidden), jnp.float32) * (1.0 / jnp.sqrt(fan_in))
        b = jnp.zeros((hidden,), jnp.float32)
        params["layers"].append({"w": w, "b": b})
        fan_in = hidden
    key, kg, kbt, km, kv = jax.random.split(key, 5)
    params["bn_gamma"] = 1.0 + 0.1 * jax.random.normal(kg, (hidden,), jnp.float32)
    params["bn_beta"] = 0.1 * jax.random.normal(kbt, (hidden,), jnp.float32)
    params["bn_mean"] = 0.05 * jax.random.normal(km, (hidden,), jnp.float32)
    params["bn_var"] = 1.0 + 0.1 * jax.random.uniform(kv, (hidden,), jnp.float32)
    return params


if __name__ == "__main__":
    # Module config: out_channels=8, heads=4 -> hidden=32; num_layers=2; dropout=0.5 (eval: id)
    N = 128          # number of graph nodes
    F_IN = 16        # input feature dim (GCNConv lazy in_channels=-1)
    HIDDEN = 8 * 4   # out_channels * heads
    NUM_LAYERS = 2
    NUM_EDGES = 512

    key = jax.random.PRNGKey(0)
    kx, ke, kp = jax.random.split(key, 3)

    x = jax.random.normal(kx, (N, F_IN), jnp.float32)
    edge_index = jax.random.randint(ke, (2, NUM_EDGES), 0, N, dtype=jnp.int32)
    params = init_params(kp, F_IN, HIDDEN, NUM_LAYERS)

    out1, out2 = gcn_model_forward(x, edge_index, params, num_nodes=N)
    jax.block_until_ready((out1, out2))

    assert out1.shape == (N, HIDDEN) and out2.shape == (N, HIDDEN)
    assert bool(jnp.all(out1 >= 0.0)) and bool(jnp.all(jnp.isfinite(out1)))
    print("KERNEL_OK")
</pallas_src>

<mosaic_0001>
module attributes {stable_mosaic.version = 11 : i64} {
  func.func @kernel(%arg0: i32, %arg1: memref<128x128xbf16, #tpu.memory_space<vmem>>, %arg2: memref<128x128xbf16, #tpu.memory_space<vmem>>, %arg3: memref<1x128xf32, #tpu.memory_space<vmem>>, %arg4: memref<128x128xbf16, #tpu.memory_space<vmem>>, %arg5: memref<1x128xf32, #tpu.memory_space<vmem>>, %arg6: memref<128x128xbf16, #tpu.memory_space<vmem>>, %arg7: memref<1x128xf32, #tpu.memory_space<vmem>>, %arg8: memref<128x128xbf16, #tpu.memory_space<vmem>>, %arg9: memref<128x128xbf16, #tpu.memory_space<vmem>>) attributes {dimension_semantics = [#tpu.dimension_semantics<arbitrary>], iteration_bounds = array<i64: 1>, scalar_prefetch = 0 : i64, scratch_operands = 1 : i64, tpu.core_type = #tpu.core_type<tc>, window_params = [{pipeline_mode = #tpu.pipeline_mode<synchronous>, transform_indices = @transform_0, window_bounds = array<i64: 128, 128>}, {pipeline_mode = #tpu.pipeline_mode<synchronous>, transform_indices = @transform_1, window_bounds = array<i64: 128, 128>}, {pipeline_mode = #tpu.pipeline_mode<synchronous>, transform_indices = @transform_2, window_bounds = array<i64: 1, 128>}, {pipeline_mode = #tpu.pipeline_mode<synchronous>, transform_indices = @transform_3, window_bounds = array<i64: 128, 128>}, {pipeline_mode = #tpu.pipeline_mode<synchronous>, transform_indices = @transform_4, window_bounds = array<i64: 1, 128>}, {pipeline_mode = #tpu.pipeline_mode<synchronous>, transform_indices = @transform_5, window_bounds = array<i64: 128, 128>}, {pipeline_mode = #tpu.pipeline_mode<synchronous>, transform_indices = @transform_6, window_bounds = array<i64: 1, 128>}, {pipeline_mode = #tpu.pipeline_mode<synchronous>, transform_indices = @transform_7, window_bounds = array<i64: 128, 128>}]} {
    %c0 = arith.constant 0 : index
    %c0_0 = arith.constant 0 : index
    %0 = vector.load %arg1[%c0, %c0_0] : memref<128x128xbf16, #tpu.memory_space<vmem>>, vector<128x128xbf16>
    %c0_1 = arith.constant 0 : index
    %c0_2 = arith.constant 0 : index
    %1 = vector.load %arg3[%c0_1, %c0_2] : memref<1x128xf32, #tpu.memory_space<vmem>>, vector<1x128xf32>
    %c0_3 = arith.constant 0 : index
    %c0_4 = arith.constant 0 : index
    %2 = vector.load %arg4[%c0_3, %c0_4] : memref<128x128xbf16, #tpu.memory_space<vmem>>, vector<128x128xbf16>
    %c0_5 = arith.constant 0 : index
    %c0_6 = arith.constant 0 : index
    %3 = vector.load %arg5[%c0_5, %c0_6] : memref<1x128xf32, #tpu.memory_space<vmem>>, vector<1x128xf32>
    %c0_7 = arith.constant 0 : index
    %c0_8 = arith.constant 0 : index
    %4 = vector.load %arg2[%c0_7, %c0_8] : memref<128x128xbf16, #tpu.memory_space<vmem>>, vector<128x128xbf16>
    %cst = arith.constant dense<0.000000e+00> : vector<128x128xf32>
    %5 = tpu.matmul %4, %2, %cst {dimension_numbers = #tpu.dot_dimension_numbers<[1], [0], [0], [1], [0, 0, 1, 1], [], []>} : vector<128x128xbf16>, vector<128x128xbf16>, vector<128x128xf32> -> vector<128x128xf32>
    %6 = arith.truncf %5 : vector<128x128xf32> to vector<128x128xbf16>
    %cst_9 = arith.constant dense<0.000000e+00> : vector<128x128xf32>
    %7 = tpu.matmul %0, %6, %cst_9 {dimension_numbers = #tpu.dot_dimension_numbers<[1], [0], [0], [1], [0, 0, 1, 1], [], []>} : vector<128x128xbf16>, vector<128x128xbf16>, vector<128x128xf32> -> vector<128x128xf32>
    %8 = vector.broadcast %1 : vector<1x128xf32> to vector<128x128xf32>
    %9 = arith.mulf %7, %8 : vector<128x128xf32>
    %10 = vector.broadcast %3 : vector<1x128xf32> to vector<128x128xf32>
    %11 = arith.addf %9, %10 : vector<128x128xf32>
    %cst_10 = arith.constant 0.000000e+00 : f32
    %12 = vector.broadcast %cst_10 : f32 to vector<128x128xf32>
    %13 = arith.maximumf %11, %12 : vector<128x128xf32>
    %14 = arith.truncf %13 : vector<128x128xf32> to vector<128x128xbf16>
    %c0_11 = arith.constant 0 : index
    %c0_12 = arith.constant 0 : index
    %15 = vector.load %arg9[%c0_11, %c0_12] : memref<128x128xbf16, #tpu.memory_space<vmem>>, vector<128x128xbf16>
    tpu.vector_store %arg9[%c0_11, %c0_12], %14 {strides = array<i32>} : memref<128x128xbf16, #tpu.memory_space<vmem>>, vector<128x128xbf16>,
    %c0_13 = arith.constant 0 : index
    %c0_14 = arith.constant 0 : index
    %16 = vector.load %arg6[%c0_13, %c0_14] : memref<128x128xbf16, #tpu.memory_space<vmem>>, vector<128x128xbf16>
    %c0_15 = arith.constant 0 : index
    %c0_16 = arith.constant 0 : index
    %17 = vector.load %arg7[%c0_15, %c0_16] : memref<1x128xf32, #tpu.memory_space<vmem>>, vector<1x128xf32>
    %c0_17 = arith.constant 0 : index
    %c0_18 = arith.constant 0 : index
    %18 = vector.load %arg9[%c0_17, %c0_18] : memref<128x128xbf16, #tpu.memory_space<vmem>>, vector<128x128xbf16>
    %cst_19 = arith.constant dense<0.000000e+00> : vector<128x128xf32>
    %19 = tpu.matmul %18, %16, %cst_19 {dimension_numbers = #tpu.dot_dimension_numbers<[1], [0], [0], [1], [0, 0, 1, 1], [], []>} : vector<128x128xbf16>, vector<128x128xbf16>, vector<128x128xf32> -> vector<128x128xf32>
    %20 = arith.truncf %19 : vector<128x128xf32> to vector<128x128xbf16>
    %cst_20 = arith.constant dense<0.000000e+00> : vector<128x128xf32>
    %21 = tpu.matmul %0, %20, %cst_20 {dimension_numbers = #tpu.dot_dimension_numbers<[1], [0], [0], [1], [0, 0, 1, 1], [], []>} : vector<128x128xbf16>, vector<128x128xbf16>, vector<128x128xf32> -> vector<128x128xf32>
    %22 = vector.broadcast %1 : vector<1x128xf32> to vector<128x128xf32>
    %23 = arith.mulf %21, %22 : vector<128x128xf32>
    %24 = vector.broadcast %17 : vector<1x128xf32> to vector<128x128xf32>
    %25 = arith.addf %23, %24 : vector<128x128xf32>
    %cst_21 = arith.constant 0.000000e+00 : f32
    %26 = vector.broadcast %cst_21 : f32 to vector<128x128xf32>
    %27 = arith.maximumf %25, %26 : vector<128x128xf32>
    %28 = arith.truncf %27 : vector<128x128xf32> to vector<128x128xbf16>
    %c0_22 = arith.constant 0 : index
    %c0_23 = arith.constant 0 : index
    %29 = vector.load %arg8[%c0_22, %c0_23] : memref<128x128xbf16, #tpu.memory_space<vmem>>, vector<128x128xbf16>
    tpu.vector_store %arg8[%c0_22, %c0_23], %28 {strides = array<i32>} : memref<128x128xbf16, #tpu.memory_space<vmem>>, vector<128x128xbf16>,
    return
  }
  func.func @transform_0(%arg0: i32) -> (i32, i32) {
    %c0_i32 = arith.constant 0 : i32
    %c0_i32_0 = arith.constant 0 : i32
    %c0_i32_1 = arith.constant 0 : i32
    return %c0_i32, %c0_i32_0 : i32, i32
  }
  func.func @transform_1(%arg0: i32) -> (i32, i32) {
    %c0_i32 = arith.constant 0 : i32
    %c0_i32_0 = arith.constant 0 : i32
    %c0_i32_1 = arith.constant 0 : i32
    return %c0_i32, %c0_i32_0 : i32, i32
  }
  func.func @transform_2(%arg0: i32) -> (i32, i32) {
    %c0_i32 = arith.constant 0 : i32
    %c0_i32_0 = arith.constant 0 : i32
    %c0_i32_1 = arith.constant 0 : i32
    return %c0_i32, %c0_i32_0 : i32, i32
  }
  func.func @transform_3(%arg0: i32) -> (i32, i32) {
    %c0_i32 = arith.constant 0 : i32
    %c0_i32_0 = arith.constant 0 : i32
    %c0_i32_1 = arith.constant 0 : i32
    return %c0_i32, %c0_i32_0 : i32, i32
  }
  func.func @transform_4(%arg0: i32) -> (i32, i32) {
    %c0_i32 = arith.constant 0 : i32
    %c0_i32_0 = arith.constant 0 : i32
    %c0_i32_1 = arith.constant 0 : i32
    return %c0_i32, %c0_i32_0 : i32, i32
  }
  func.func @transform_5(%arg0: i32) -> (i32, i32) {
    %c0_i32 = arith.constant 0 : i32
    %c0_i32_0 = arith.constant 0 : i32
    %c0_i32_1 = arith.constant 0 : i32
    return %c0_i32, %c0_i32_0 : i32, i32
  }
  func.func @transform_6(%arg0: i32) -> (i32, i32) {
    %c0_i32 = arith.constant 0 : i32
    %c0_i32_0 = arith.constant 0 : i32
    %c0_i32_1 = arith.constant 0 : i32
    return %c0_i32, %c0_i32_0 : i32, i32
  }
  func.func @transform_7(%arg0: i32) -> (i32, i32) {
    %c0_i32 = arith.constant 0 : i32
    %c0_i32_0 = arith.constant 0 : i32
    %c0_i32_1 = arith.constant 0 : i32
    return %c0_i32, %c0_i32_0 : i32, i32
  }
}

</mosaic_0001>

<llo_original>
// kernel: gcn_model_forward.1
$region0: #{gcn_model_forward.1}
  #allocation0 [shape = 'u32[]', space=smem, size = 0x4, offset = 0x4, fixed_abs, tag = 'smem constant byte address 0x4 - core index']
  #allocation1 [shape = 'u32[72,128]{1,0:T(1,128)}', space=vmem, size = 0x9000, scoped, tag = 'internal scratch']
  #allocation2 [shape = 'bf16[128,128]{1,0:T(8,128)(2,1)}', space=vmem, size = 0x8000, scoped, tag = 'scratch operand']
  %s0 = inlined_call_operand.vmem [shape: bf16[128,128], index: 0, kind: input, shape index: {}]
  %s1 = inlined_call_operand.vmem [shape: bf16[128,128], index: 1, kind: input, shape index: {}]
  %s2 = inlined_call_operand.vmem [shape: f32[1,128], index: 2, kind: input, shape index: {}]
  %s3 = inlined_call_operand.vmem [shape: bf16[128,128], index: 3, kind: input, shape index: {}]
  %s4 = inlined_call_operand.vmem [shape: f32[1,128], index: 4, kind: input, shape index: {}]
  %s5 = inlined_call_operand.vmem [shape: bf16[128,128], index: 5, kind: input, shape index: {}]
  %s6 = inlined_call_operand.vmem [shape: f32[1,128], index: 6, kind: input, shape index: {}]
  %s7 = inlined_call_operand.vmem [shape: bf16[128,128], index: 7, kind: output, shape index: {}]
  %s8 = sld [smem:[#allocation0]]
  $region38: #{gcn_model_forward.1} parent=0
    _
  %s10 = ssub.s32 1, %s8
  %s11 = scalar_select 0, %s10, %s8
  // Predicated region
  $region2: #{gcn_model_forward.1} parent=0 // pred_check
    _
  $region3: #{gcn_model_forward.1} parent=0 // pred_check_branch
    %13 = sbr.rel (0) target = $region5
  $region4: #{gcn_model_forward.1} parent=0 // pred_region
    _
  $region5: #{gcn_model_forward.1} parent=0 // pred_fallthru
    _
  // Predicated region
  $region6: #{gcn_model_forward.1} parent=0 // pred_check
    _
  $region7: #{gcn_model_forward.1} parent=0 // pred_check_branch
    %15 = sbr.rel (0) target = $region9
  $region8: #{gcn_model_forward.1} parent=0 // pred_region
    _
  $region9: #{gcn_model_forward.1} parent=0 // pred_fallthru
    _
  // Predicated region
  $region10: #{gcn_model_forward.1} parent=0 // pred_check
    _
  $region11: #{gcn_model_forward.1} parent=0 // pred_check_branch
    %17 = sbr.rel (0) target = $region13
  $region12: #{gcn_model_forward.1} parent=0 // pred_region
    _
  $region13: #{gcn_model_forward.1} parent=0 // pred_fallthru
    _
  // Predicated region
  $region14: #{gcn_model_forward.1} parent=0 // pred_check
    _
  $region15: #{gcn_model_forward.1} parent=0 // pred_check_branch
    %19 = sbr.rel (0) target = $region17
  $region16: #{gcn_model_forward.1} parent=0 // pred_region
    _
  $region17: #{gcn_model_forward.1} parent=0 // pred_fallthru
    _
  // Predicated region
  $region18: #{gcn_model_forward.1} parent=0 // pred_check
    _
  $region19: #{gcn_model_forward.1} parent=0 // pred_check_branch
    %21 = sbr.rel (0) target = $region21
  $region20: #{gcn_model_forward.1} parent=0 // pred_region
    _
  $region21: #{gcn_model_forward.1} parent=0 // pred_fallthru
    _
  // Predicated region
  $region22: #{gcn_model_forward.1} parent=0 // pred_check
    _
  $region23: #{gcn_model_forward.1} parent=0 // pred_check_branch
    %23 = sbr.rel (0) target = $region25
  $region24: #{gcn_model_forward.1} parent=0 // pred_region
    _
  $region25: #{gcn_model_forward.1} parent=0 // pred_fallthru
    _
  // Predicated region
  $region26: #{gcn_model_forward.1} parent=0 // pred_check
    _
  $region27: #{gcn_model_forward.1} parent=0 // pred_check_branch
    %25 = sbr.rel (0) target = $region29
  $region28: #{gcn_model_forward.1} parent=0 // pred_region
    _
  $region29: #{gcn_model_forward.1} parent=0 // pred_fallthru
    _
  %v26 = vld [vmem:[%s0] sm:$0xf]
  %v27 = vld [vmem:[%s0 + $0x4] sm:$0xf]
  %v28 = vld [vmem:[%s0 + $0x8] sm:$0xf]
  %v29 = vld [vmem:[%s0 + $0xc] sm:$0xf]
  %v30 = vld [vmem:[%s0 + $0x10] sm:$0xf]
  %v31 = vld [vmem:[%s0 + $0x14] sm:$0xf]
  %v32 = vld [vmem:[%s0 + $0x18] sm:$0xf]
  %v33 = vld [vmem:[%s0 + $0x1c] sm:$0xf]
  %v34 = vld [vmem:[%s0 + $0x20] sm:$0xf]
  %v35 = vld [vmem:[%s0 + $0x24] sm:$0xf]
  %v36 = vld [vmem:[%s0 + $0x28] sm:$0xf]
  %v37 = vld [vmem:[%s0 + $0x2c] sm:$0xf]
  %v38 = vld [vmem:[%s0 + $0x30] sm:$0xf]
  %v39 = vld [vmem:[%s0 + $0x34] sm:$0xf]
  %v40 = vld [vmem:[%s0 + $0x38] sm:$0xf]
  %v41 = vld [vmem:[%s0 + $0x3c] sm:$0xf]
  %v42 = vld [vmem:[%s2] sm:$0x1]
  %v43 = vld [vmem:[%s3] sm:$0xf]
  %v44 = vld [vmem:[%s3 + $0x4] sm:$0xf]
  %v45 = vld [vmem:[%s3 + $0x8] sm:$0xf]
  %v46 = vld [vmem:[%s3 + $0xc] sm:$0xf]
  %v47 = vld [vmem:[%s3 + $0x10] sm:$0xf]
  %v48 = vld [vmem:[%s3 + $0x14] sm:$0xf]
  %v49 = vld [vmem:[%s3 + $0x18] sm:$0xf]
  %v50 = vld [vmem:[%s3 + $0x1c] sm:$0xf]
  %v51 = vld [vmem:[%s3 + $0x20] sm:$0xf]
  %v52 = vld [vmem:[%s3 + $0x24] sm:$0xf]
  %v53 = vld [vmem:[%s3 + $0x28] sm:$0xf]
  %v54 = vld [vmem:[%s3 + $0x2c] sm:$0xf]
  %v55 = vld [vmem:[%s3 + $0x30] sm:$0xf]
  %v56 = vld [vmem:[%s3 + $0x34] sm:$0xf]
  %v57 = vld [vmem:[%s3 + $0x38] sm:$0xf]
  %v58 = vld [vmem:[%s3 + $0x3c] sm:$0xf]
  %v59 = vld [vmem:[%s4] sm:$0x1]
  %v60 = vld [vmem:[%s1] sm:$0xf]
  %v61 = vld [vmem:[%s1 + $0x4] sm:$0xf]
  %v62 = vld [vmem:[%s1 + $0x8] sm:$0xf]
  %v63 = vld [vmem:[%s1 + $0xc] sm:$0xf]
  %v64 = vld [vmem:[%s1 + $0x10] sm:$0xf]
  %v65 = vld [vmem:[%s1 + $0x14] sm:$0xf]
  %v66 = vld [vmem:[%s1 + $0x18] sm:$0xf]
  %v67 = vld [vmem:[%s1 + $0x1c] sm:$0xf]
  %v68 = vld [vmem:[%s1 + $0x20] sm:$0xf]
  %v69 = vld [vmem:[%s1 + $0x24] sm:$0xf]
  %v70 = vld [vmem:[%s1 + $0x28] sm:$0xf]
  %v71 = vld [vmem:[%s1 + $0x2c] sm:$0xf]
  %v72 = vld [vmem:[%s1 + $0x30] sm:$0xf]
  %v73 = vld [vmem:[%s1 + $0x34] sm:$0xf]
  %v74 = vld [vmem:[%s1 + $0x38] sm:$0xf]
  %v75 = vld [vmem:[%s1 + $0x3c] sm:$0xf]
  %v92 = vunpack.c.l.b16 %v60
  %v93 = vunpack.c.l.b16 %v61
  %v94 = vunpack.c.l.b16 %v62
  %v95 = vunpack.c.l.b16 %v63
  %v96 = vunpack.c.l.b16 %v64
  %v97 = vunpack.c.l.b16 %v65
  %v98 = vunpack.c.l.b16 %v66
  %v99 = vunpack.c.l.b16 %v67
  %v100 = vunpack.c.l.b16 %v68
  %v101 = vunpack.c.l.b16 %v69
  %v102 = vunpack.c.l.b16 %v70
  %v103 = vunpack.c.l.b16 %v71
  %v104 = vunpack.c.l.b16 %v72
  %v105 = vunpack.c.l.b16 %v73
  %v106 = vunpack.c.l.b16 %v74
  %v107 = vunpack.c.l.b16 %v75
  %v108 = vpack.c.b16 %v93, %v92
  %v109 = vpack.c.b16 %v95, %v94
  %v110 = vpack.c.b16 %v97, %v96
  %v111 = vpack.c.b16 %v99, %v98
  %v112 = vpack.c.b16 %v101, %v100
  %v113 = vpack.c.b16 %v103, %v102
  %v114 = vpack.c.b16 %v105, %v104
  %v115 = vpack.c.b16 %v107, %v106
  %v140 = vunpack.c.l.b16 %v43
  %v141 = vunpack.c.l.b16 %v44
  %v142 = vunpack.c.l.b16 %v45
  %v143 = vunpack.c.l.b16 %v46
  %v144 = vunpack.c.l.b16 %v47
  %v145 = vunpack.c.l.b16 %v48
  %v146 = vunpack.c.l.b16 %v49
  %v147 = vunpack.c.l.b16 %v50
  %v148 = vunpack.c.l.b16 %v51
  %v149 = vunpack.c.l.b16 %v52
  %v150 = vunpack.c.l.b16 %v53
  %v151 = vunpack.c.l.b16 %v54
  %v152 = vunpack.c.l.b16 %v55
  %v153 = vunpack.c.l.b16 %v56
  %v154 = vunpack.c.l.b16 %v57
  %v155 = vunpack.c.l.b16 %v58
  %v156 = vpack.c.b16 %v141, %v140
  %v157 = vpack.c.b16 %v143, %v142
  %v158 = vpack.c.b16 %v145, %v144
  %v159 = vpack.c.b16 %v147, %v146
  %v160 = vpack.c.b16 %v149, %v148
  %v161 = vpack.c.b16 %v151, %v150
  %v162 = vpack.c.b16 %v153, %v152
  %v163 = vpack.c.b16 %v155, %v154
  %172 = vmatpush.bf16.msra.mxu0 %v163
  %173 = vmatpush.bf16.msra.mxu0 %v162
  %174 = vmatpush.bf16.msra.mxu0 %v161
  %175 = vmatpush.bf16.msra.mxu0 %v160
  %176 = vmatpush.bf16.msra.mxu0 %v159
  %177 = vmatpush.bf16.msra.mxu0 %v158
  %178 = vmatpush.bf16.msra.mxu0 %v157
  %179 = vmatpush.bf16.msra.mxu0 %v156
  %180 = vmatmul.bf16.gmra.mxu0 %v108
  %v181 = vpop.f32.mrf.mxu0
  %v182 = vadd.f32 0.0, %v181
  %v183 = vpop.f32.mrf.mxu0
  %v184 = vadd.f32 0.0, %v183
  %185 = vmatmul.bf16.gmra.mxu0 %v109
  %v186 = vpop.f32.mrf.mxu0
  %v187 = vadd.f32 0.0, %v186
  %v188 = vpop.f32.mrf.mxu0
  %v189 = vadd.f32 0.0, %v188
  %190 = vmatmul.bf16.gmra.mxu0 %v110
  %v191 = vpop.f32.mrf.mxu0
  %v192 = vadd.f32 0.0, %v191
  %v193 = vpop.f32.mrf.mxu0
  %v194 = vadd.f32 0.0, %v193
  %195 = vmatmul.bf16.gmra.mxu0 %v111
  %v196 = vpop.f32.mrf.mxu0
  %v197 = vadd.f32 0.0, %v196
  %v198 = vpop.f32.mrf.mxu0
  %v199 = vadd.f32 0.0, %v198
  %200 = vmatmul.bf16.gmra.mxu0 %v112
  %v201 = vpop.f32.mrf.mxu0
  %v202 = vadd.f32 0.0, %v201
  %v203 = vpop.f32.mrf.mxu0
  %v204 = vadd.f32 0.0, %v203
  %205 = vmatmul.bf16.gmra.mxu0 %v113
  %v206 = vpop.f32.mrf.mxu0
  %v207 = vadd.f32 0.0, %v206
  %v208 = vpop.f32.mrf.mxu0
  %v209 = vadd.f32 0.0, %v208
  %210 = vmatmul.bf16.gmra.mxu0 %v114
  %v211 = vpop.f32.mrf.mxu0
  %v212 = vadd.f32 0.0, %v211
  %v213 = vpop.f32.mrf.mxu0
  %v214 = vadd.f32 0.0, %v213
  %215 = vmatmul.bf16.gmra.mxu0 %v115
  %v216 = vpop.f32.mrf.mxu0
  %v217 = vadd.f32 0.0, %v216
  %v218 = vpop.f32.mrf.mxu0
  %v219 = vadd.f32 0.0, %v218
  %220 = vdwg.mxu0
  %v221 = vpack.c.bf16 %v184, %v182
  %v222 = vpack.c.bf16 %v189, %v187
  %v223 = vpack.c.bf16 %v194, %v192
  %v224 = vpack.c.bf16 %v199, %v197
  %v225 = vpack.c.bf16 %v204, %v202
  %v226 = vpack.c.bf16 %v209, %v207
  %v227 = vpack.c.bf16 %v214, %v212
  %v228 = vpack.c.bf16 %v219, %v217
  %v245 = vunpack.c.l.b16 %v26
  %v246 = vunpack.c.l.b16 %v27
  %v247 = vunpack.c.l.b16 %v28
  %v248 = vunpack.c.l.b16 %v29
  %v249 = vunpack.c.l.b16 %v30
  %v250 = vunpack.c.l.b16 %v31
  %v251 = vunpack.c.l.b16 %v32
  %v252 = vunpack.c.l.b16 %v33
  %v253 = vunpack.c.l.b16 %v34
  %v254 = vunpack.c.l.b16 %v35
  %v255 = vunpack.c.l.b16 %v36
  %v256 = vunpack.c.l.b16 %v37
  %v257 = vunpack.c.l.b16 %v38
  %v258 = vunpack.c.l.b16 %v39
  %v259 = vunpack.c.l.b16 %v40
  %v260 = vunpack.c.l.b16 %v41
  %v261 = vpack.c.b16 %v246, %v245
  %v262 = vpack.c.b16 %v248, %v247
  %v263 = vpack.c.b16 %v250, %v249
  %v264 = vpack.c.b16 %v252, %v251
  %v265 = vpack.c.b16 %v254, %v253
  %v266 = vpack.c.b16 %v256, %v255
  %v267 = vpack.c.b16 %v258, %v257
  %v268 = vpack.c.b16 %v260, %v259
  %277 = vmatpush.bf16.msra.mxu0 %v228
  %278 = vmatpush.bf16.msra.mxu0 %v227
  %279 = vmatpush.bf16.msra.mxu0 %v226
  %280 = vmatpush.bf16.msra.mxu0 %v225
  %281 = vmatpush.bf16.msra.mxu0 %v224
  %282 = vmatpush.bf16.msra.mxu0 %v223
  %283 = vmatpush.bf16.msra.mxu0 %v222
  %284 = vmatpush.bf16.msra.mxu0 %v221
  %285 = vmatmul.bf16.gmra.mxu0 %v261
  %v286 = vpop.f32.mrf.mxu0
  %v287 = vadd.f32 0.0, %v286
  %v288 = vpop.f32.mrf.mxu0
  %v289 = vadd.f32 0.0, %v288
  %290 = vmatmul.bf16.gmra.mxu0 %v262
  %v291 = vpop.f32.mrf.mxu0
  %v292 = vadd.f32 0.0, %v291
  %v293 = vpop.f32.mrf.mxu0
  %v294 = vadd.f32 0.0, %v293
  %295 = vmatmul.bf16.gmra.mxu0 %v263
  %v296 = vpop.f32.mrf.mxu0
  %v297 = vadd.f32 0.0, %v296
  %v298 = vpop.f32.mrf.mxu0
  %v299 = vadd.f32 0.0, %v298
  %300 = vmatmul.bf16.gmra.mxu0 %v264
  %v301 = vpop.f32.mrf.mxu0
  %v302 = vadd.f32 0.0, %v301
  %v303 = vpop.f32.mrf.mxu0
  %v304 = vadd.f32 0.0, %v303
  %305 = vmatmul.bf16.gmra.mxu0 %v265
  %v306 = vpop.f32.mrf.mxu0
  %v307 = vadd.f32 0.0, %v306
  %v308 = vpop.f32.mrf.mxu0
  %v309 = vadd.f32 0.0, %v308
  %310 = vmatmul.bf16.gmra.mxu0 %v266
  %v311 = vpop.f32.mrf.mxu0
  %v312 = vadd.f32 0.0, %v311
  %v313 = vpop.f32.mrf.mxu0
  %v314 = vadd.f32 0.0, %v313
  %315 = vmatmul.bf16.gmra.mxu0 %v267
  %v316 = vpop.f32.mrf.mxu0
  %v317 = vadd.f32 0.0, %v316
  %v318 = vpop.f32.mrf.mxu0
  %v319 = vadd.f32 0.0, %v318
  %320 = vmatmul.bf16.gmra.mxu0 %v268
  %v321 = vpop.f32.mrf.mxu0
  %v322 = vadd.f32 0.0, %v321
  %v323 = vpop.f32.mrf.mxu0
  %v324 = vadd.f32 0.0, %v323
  %325 = vdwg.mxu0
  %v327 = vperm.slane %v42, 0
  %v329 = vmul.f32 %v287, %v327
  %v330 = vmul.f32 %v289, %v327
  %v331 = vmul.f32 %v292, %v327
  %v332 = vmul.f32 %v294, %v327
  %v333 = vmul.f32 %v297, %v327
  %v334 = vmul.f32 %v299, %v327
  %v335 = vmul.f32 %v302, %v327
  %v336 = vmul.f32 %v304, %v327
  %v337 = vmul.f32 %v307, %v327
  %v338 = vmul.f32 %v309, %v327
  %v339 = vmul.f32 %v312, %v327
  %v340 = vmul.f32 %v314, %v327
  %v341 = vmul.f32 %v317, %v327
  %v342 = vmul.f32 %v319, %v327
  %v343 = vmul.f32 %v322, %v327
  %v344 = vmul.f32 %v324, %v327
  %v346 = vperm.slane %v59, 0
  %v348 = vadd.f32 %v329, %v346
  %v349 = vadd.f32 %v330, %v346
  %v350 = vadd.f32 %v331, %v346
  %v351 = vadd.f32 %v332, %v346
  %v352 = vadd.f32 %v333, %v346
  %v353 = vadd.f32 %v334, %v346
  %v354 = vadd.f32 %v335, %v346
  %v355 = vadd.f32 %v336, %v346
  %v356 = vadd.f32 %v337, %v346
  %v357 = vadd.f32 %v338, %v346
  %v358 = vadd.f32 %v339, %v346
  %v359 = vadd.f32 %v340, %v346
  %v360 = vadd.f32 %v341, %v346
  %v361 = vadd.f32 %v342, %v346
  %v362 = vadd.f32 %v343, %v346
  %v363 = vadd.f32 %v344, %v346
  %v364 = vmax.f32 %v348, 0.0
  %v365 = vmax.f32 %v349, 0.0
  %v366 = vmax.f32 %v350, 0.0
  %v367 = vmax.f32 %v351, 0.0
  %v368 = vmax.f32 %v352, 0.0
  %v369 = vmax.f32 %v353, 0.0
  %v370 = vmax.f32 %v354, 0.0
  %v371 = vmax.f32 %v355, 0.0
  %v372 = vmax.f32 %v356, 0.0
  %v373 = vmax.f32 %v357, 0.0
  %v374 = vmax.f32 %v358, 0.0
  %v375 = vmax.f32 %v359, 0.0
  %v376 = vmax.f32 %v360, 0.0
  %v377 = vmax.f32 %v361, 0.0
  %v378 = vmax.f32 %v362, 0.0
  %v379 = vmax.f32 %v363, 0.0
  %v380 = vpack.c.bf16 %v364, %v364
  %v381 = vpack.c.bf16 %v365, %v365
  %v382 = vpack.c.bf16 %v366, %v366
  %v383 = vpack.c.bf16 %v367, %v367
  %v384 = vpack.c.bf16 %v368, %v368
  %v385 = vpack.c.bf16 %v369, %v369
  %v386 = vpack.c.bf16 %v370, %v370
  %v387 = vpack.c.bf16 %v371, %v371
  %v388 = vpack.c.bf16 %v372, %v372
  %v389 = vpack.c.bf16 %v373, %v373
  %v390 = vpack.c.bf16 %v374, %v374
  %v391 = vpack.c.bf16 %v375, %v375
  %v392 = vpack.c.bf16 %v376, %v376
  %v393 = vpack.c.bf16 %v377, %v377
  %v394 = vpack.c.bf16 %v378, %v378
  %v395 = vpack.c.bf16 %v379, %v379
  %396 = vst [vmem:[#allocation2] sm:$0xf] %v380
  %397 = vst [vmem:[#allocation2 + $0x4] sm:$0xf] %v381
  %398 = vst [vmem:[#allocation2 + $0x8] sm:$0xf] %v382
  %399 = vst [vmem:[#allocation2 + $0xc] sm:$0xf] %v383
  %400 = vst [vmem:[#allocation2 + $0x10] sm:$0xf] %v384
  %401 = vst [vmem:[#allocation2 + $0x14] sm:$0xf] %v385
  %402 = vst [vmem:[#allocation2 + $0x18] sm:$0xf] %v386
  %403 = vst [vmem:[#allocation2 + $0x1c] sm:$0xf] %v387
  %404 = vst [vmem:[#allocation2 + $0x20] sm:$0xf] %v388
  %405 = vst [vmem:[#allocation2 + $0x24] sm:$0xf] %v389
  %406 = vst [vmem:[#allocation2 + $0x28] sm:$0xf] %v390
  %407 = vst [vmem:[#allocation2 + $0x2c] sm:$0xf] %v391
  %408 = vst [vmem:[#allocation2 + $0x30] sm:$0xf] %v392
  %409 = vst [vmem:[#allocation2 + $0x34] sm:$0xf] %v393
  %410 = vst [vmem:[#allocation2 + $0x38] sm:$0xf] %v394
  %411 = vst [vmem:[#allocation2 + $0x3c] sm:$0xf] %v395
  %v412 = vld [vmem:[%s5] sm:$0xf]
  %v413 = vld [vmem:[%s5 + $0x4] sm:$0xf]
  %v414 = vld [vmem:[%s5 + $0x8] sm:$0xf]
  %v415 = vld [vmem:[%s5 + $0xc] sm:$0xf]
  %v416 = vld [vmem:[%s5 + $0x10] sm:$0xf]
  %v417 = vld [vmem:[%s5 + $0x14] sm:$0xf]
  %v418 = vld [vmem:[%s5 + $0x18] sm:$0xf]
  %v419 = vld [vmem:[%s5 + $0x1c] sm:$0xf]
  %v420 = vld [vmem:[%s5 + $0x20] sm:$0xf]
  %v421 = vld [vmem:[%s5 + $0x24] sm:$0xf]
  %v422 = vld [vmem:[%s5 + $0x28] sm:$0xf]
  %v423 = vld [vmem:[%s5 + $0x2c] sm:$0xf]
  %v424 = vld [vmem:[%s5 + $0x30] sm:$0xf]
  %v425 = vld [vmem:[%s5 + $0x34] sm:$0xf]
  %v426 = vld [vmem:[%s5 + $0x38] sm:$0xf]
  %v427 = vld [vmem:[%s5 + $0x3c] sm:$0xf]
  %v428 = vld [vmem:[%s6] sm:$0x1]
  %v429 = vld [vmem:[#allocation2] sm:$0xf]
  %v430 = vld [vmem:[#allocation2 + $0x4] sm:$0xf]
  %v431 = vld [vmem:[#allocation2 + $0x8] sm:$0xf]
  %v432 = vld [vmem:[#allocation2 + $0xc] sm:$0xf]
  %v433 = vld [vmem:[#allocation2 + $0x10] sm:$0xf]
  %v434 = vld [vmem:[#allocation2 + $0x14] sm:$0xf]
  %v435 = vld [vmem:[#allocation2 + $0x18] sm:$0xf]
  %v436 = vld [vmem:[#allocation2 + $0x1c] sm:$0xf]
  %v437 = vld [vmem:[#allocation2 + $0x20] sm:$0xf]
  %v438 = vld [vmem:[#allocation2 + $0x24] sm:$0xf]
  %v439 = vld [vmem:[#allocation2 + $0x28] sm:$0xf]
  %v440 = vld [vmem:[#allocation2 + $0x2c] sm:$0xf]
  %v441 = vld [vmem:[#allocation2 + $0x30] sm:$0xf]
  %v442 = vld [vmem:[#allocation2 + $0x34] sm:$0xf]
  %v443 = vld [vmem:[#allocation2 + $0x38] sm:$0xf]
  %v444 = vld [vmem:[#allocation2 + $0x3c] sm:$0xf]
  %v461 = vunpack.c.l.b16 %v429
  %v462 = vunpack.c.l.b16 %v430
  %v463 = vunpack.c.l.b16 %v431
  %v464 = vunpack.c.l.b16 %v432
  %v465 = vunpack.c.l.b16 %v433
  %v466 = vunpack.c.l.b16 %v434
  %v467 = vunpack.c.l.b16 %v435
  %v468 = vunpack.c.l.b16 %v436
  %v469 = vunpack.c.l.b16 %v437
  %v470 = vunpack.c.l.b16 %v438
  %v471 = vunpack.c.l.b16 %v439
  %v472 = vunpack.c.l.b16 %v440
  %v473 = vunpack.c.l.b16 %v441
  %v474 = vunpack.c.l.b16 %v442
  %v475 = vunpack.c.l.b16 %v443
  %v476 = vunpack.c.l.b16 %v444
  %v477 = vpack.c.b16 %v462, %v461
  %v478 = vpack.c.b16 %v464, %v463
  %v479 = vpack.c.b16 %v466, %v465
  %v480 = vpack.c.b16 %v468, %v467
  %v481 = vpack.c.b16 %v470, %v469
  %v482 = vpack.c.b16 %v472, %v471
  %v483 = vpack.c.b16 %v474, %v473
  %v484 = vpack.c.b16 %v476, %v475
  %v509 = vunpack.c.l.b16 %v412
  %v510 = vunpack.c.l.b16 %v413
  %v511 = vunpack.c.l.b16 %v414
  %v512 = vunpack.c.l.b16 %v415
  %v513 = vunpack.c.l.b16 %v416
  %v514 = vunpack.c.l.b16 %v417
  %v515 = vunpack.c.l.b16 %v418
  %v516 = vunpack.c.l.b16 %v419
  %v517 = vunpack.c.l.b16 %v420
  %v518 = vunpack.c.l.b16 %v421
  %v519 = vunpack.c.l.b16 %v422
  %v520 = vunpack.c.l.b16 %v423
  %v521 = vunpack.c.l.b16 %v424
  %v522 = vunpack.c.l.b16 %v425
  %v523 = vunpack.c.l.b16 %v426
  %v524 = vunpack.c.l.b16 %v427
  %v525 = vpack.c.b16 %v510, %v509
  %v526 = vpack.c.b16 %v512, %v511
  %v527 = vpack.c.b16 %v514, %v513
  %v528 = vpack.c.b16 %v516, %v515
  %v529 = vpack.c.b16 %v518, %v517
  %v530 = vpack.c.b16 %v520, %v519
  %v531 = vpack.c.b16 %v522, %v521
  %v532 = vpack.c.b16 %v524, %v523
  %541 = vmatpush.bf16.msra.mxu0 %v532
  %542 = vmatpush.bf16.msra.mxu0 %v531
  %543 = vmatpush.bf16.msra.mxu0 %v530
  %544 = vmatpush.bf16.msra.mxu0 %v529
  %545 = vmatpush.bf16.msra.mxu0 %v528
  %546 = vmatpush.bf16.msra.mxu0 %v527
  %547 = vmatpush.bf16.msra.mxu0 %v526
  %548 = vmatpush.bf16.msra.mxu0 %v525
  %549 = vmatmul.bf16.gmra.mxu0 %v477
  %v550 = vpop.f32.mrf.mxu0
  %v551 = vadd.f32 0.0, %v550
  %v552 = vpop.f32.mrf.mxu0
  %v553 = vadd.f32 0.0, %v552
  %554 = vmatmul.bf16.gmra.mxu0 %v478
  %v555 = vpop.f32.mrf.mxu0
  %v556 = vadd.f32 0.0, %v555
  %v557 = vpop.f32.mrf.mxu0
  %v558 = vadd.f32 0.0, %v557
  %559 = vmatmul.bf16.gmra.mxu0 %v479
  %v560 = vpop.f32.mrf.mxu0
  %v561 = vadd.f32 0.0, %v560
  %v562 = vpop.f32.mrf.mxu0
  %v563 = vadd.f32 0.0, %v562
  %564 = vmatmul.bf16.gmra.mxu0 %v480
  %v565 = vpop.f32.mrf.mxu0
  %v566 = vadd.f32 0.0, %v565
  %v567 = vpop.f32.mrf.mxu0
  %v568 = vadd.f32 0.0, %v567
  %569 = vmatmul.bf16.gmra.mxu0 %v481
  %v570 = vpop.f32.mrf.mxu0
  %v571 = vadd.f32 0.0, %v570
  %v572 = vpop.f32.mrf.mxu0
  %v573 = vadd.f32 0.0, %v572
  %574 = vmatmul.bf16.gmra.mxu0 %v482
  %v575 = vpop.f32.mrf.mxu0
  %v576 = vadd.f32 0.0, %v575
  %v577 = vpop.f32.mrf.mxu0
  %v578 = vadd.f32 0.0, %v577
  %579 = vmatmul.bf16.gmra.mxu0 %v483
  %v580 = vpop.f32.mrf.mxu0
  %v581 = vadd.f32 0.0, %v580
  %v582 = vpop.f32.mrf.mxu0
  %v583 = vadd.f32 0.0, %v582
  %584 = vmatmul.bf16.gmra.mxu0 %v484
  %v585 = vpop.f32.mrf.mxu0
  %v586 = vadd.f32 0.0, %v585
  %v587 = vpop.f32.mrf.mxu0
  %v588 = vadd.f32 0.0, %v587
  %589 = vdwg.mxu0
  %v590 = vpack.c.bf16 %v553, %v551
  %v591 = vpack.c.bf16 %v558, %v556
  %v592 = vpack.c.bf16 %v563, %v561
  %v593 = vpack.c.bf16 %v568, %v566
  %v594 = vpack.c.bf16 %v573, %v571
  %v595 = vpack.c.bf16 %v578, %v576
  %v596 = vpack.c.bf16 %v583, %v581
  %v597 = vpack.c.bf16 %v588, %v586
  %598 = vmatpush.bf16.msra.mxu0 %v597
  %599 = vmatpush.bf16.msra.mxu0 %v596
  %600 = vmatpush.bf16.msra.mxu0 %v595
  %601 = vmatpush.bf16.msra.mxu0 %v594
  %602 = vmatpush.bf16.msra.mxu0 %v593
  %603 = vmatpush.bf16.msra.mxu0 %v592
  %604 = vmatpush.bf16.msra.mxu0 %v591
  %605 = vmatpush.bf16.msra.mxu0 %v590
  %606 = vmatmul.bf16.gmra.mxu0 %v261
  %v607 = vpop.f32.mrf.mxu0
  %v608 = vadd.f32 0.0, %v607
  %v609 = vpop.f32.mrf.mxu0
  %v610 = vadd.f32 0.0, %v609
  %611 = vmatmul.bf16.gmra.mxu0 %v262
  %v612 = vpop.f32.mrf.mxu0
  %v613 = vadd.f32 0.0, %v612
  %v614 = vpop.f32.mrf.mxu0
  %v615 = vadd.f32 0.0, %v614
  %616 = vmatmul.bf16.gmra.mxu0 %v263
  %v617 = vpop.f32.mrf.mxu0
  %v618 = vadd.f32 0.0, %v617
  %v619 = vpop.f32.mrf.mxu0
  %v620 = vadd.f32 0.0, %v619
  %621 = vmatmul.bf16.gmra.mxu0 %v264
  %v622 = vpop.f32.mrf.mxu0
  %v623 = vadd.f32 0.0, %v622
  %v624 = vpop.f32.mrf.mxu0
  %v625 = vadd.f32 0.0, %v624
  %626 = vmatmul.bf16.gmra.mxu0 %v265
  %v627 = vpop.f32.mrf.mxu0
  %v628 = vadd.f32 0.0, %v627
  %v629 = vpop.f32.mrf.mxu0
  %v630 = vadd.f32 0.0, %v629
  %631 = vmatmul.bf16.gmra.mxu0 %v266
  %v632 = vpop.f32.mrf.mxu0
  %v633 = vadd.f32 0.0, %v632
  %v634 = vpop.f32.mrf.mxu0
  %v635 = vadd.f32 0.0, %v634
  %636 = vmatmul.bf16.gmra.mxu0 %v267
  %v637 = vpop.f32.mrf.mxu0
  %v638 = vadd.f32 0.0, %v637
  %v639 = vpop.f32.mrf.mxu0
  %v640 = vadd.f32 0.0, %v639
  %641 = vmatmul.bf16.gmra.mxu0 %v268
  %v642 = vpop.f32.mrf.mxu0
  %v643 = vadd.f32 0.0, %v642
  %v644 = vpop.f32.mrf.mxu0
  %v645 = vadd.f32 0.0, %v644
  %646 = vdwg.mxu0
  %v647 = vmul.f32 %v608, %v327
  %v648 = vmul.f32 %v610, %v327
  %v649 = vmul.f32 %v613, %v327
  %v650 = vmul.f32 %v615, %v327
  %v651 = vmul.f32 %v618, %v327
  %v652 = vmul.f32 %v620, %v327
  %v653 = vmul.f32 %v623, %v327
  %v654 = vmul.f32 %v625, %v327
  %v655 = vmul.f32 %v628, %v327
  %v656 = vmul.f32 %v630, %v327
  %v657 = vmul.f32 %v633, %v327
  %v658 = vmul.f32 %v635, %v327
  %v659 = vmul.f32 %v638, %v327
  %v660 = vmul.f32 %v640, %v327
  %v661 = vmul.f32 %v643, %v327
  %v662 = vmul.f32 %v645, %v327
  %v664 = vperm.slane %v428, 0
  %v666 = vadd.f32 %v647, %v664
  %v667 = vadd.f32 %v648, %v664
  %v668 = vadd.f32 %v649, %v664
  %v669 = vadd.f32 %v650, %v664
  %v670 = vadd.f32 %v651, %v664
  %v671 = vadd.f32 %v652, %v664
  %v672 = vadd.f32 %v653, %v664
  %v673 = vadd.f32 %v654, %v664
  %v674 = vadd.f32 %v655, %v664
  %v675 = vadd.f32 %v656, %v664
  %v676 = vadd.f32 %v657, %v664
  %v677 = vadd.f32 %v658, %v664
  %v678 = vadd.f32 %v659, %v664
  %v679 = vadd.f32 %v660, %v664
  %v680 = vadd.f32 %v661, %v664
  %v681 = vadd.f32 %v662, %v664
  %v682 = vmax.f32 %v666, 0.0
  %v683 = vmax.f32 %v667, 0.0
  %v684 = vmax.f32 %v668, 0.0
  %v685 = vmax.f32 %v669, 0.0
  %v686 = vmax.f32 %v670, 0.0
  %v687 = vmax.f32 %v671, 0.0
  %v688 = vmax.f32 %v672, 0.0
  %v689 = vmax.f32 %v673, 0.0
  %v690 = vmax.f32 %v674, 0.0
  %v691 = vmax.f32 %v675, 0.0
  %v692 = vmax.f32 %v676, 0.0
  %v693 = vmax.f32 %v677, 0.0
  %v694 = vmax.f32 %v678, 0.0
  %v695 = vmax.f32 %v679, 0.0
  %v696 = vmax.f32 %v680, 0.0
  %v697 = vmax.f32 %v681, 0.0
  %v698 = vpack.c.bf16 %v682, %v682
  %v699 = vpack.c.bf16 %v683, %v683
  %v700 = vpack.c.bf16 %v684, %v684
  %v701 = vpack.c.bf16 %v685, %v685
  %v702 = vpack.c.bf16 %v686, %v686
  %v703 = vpack.c.bf16 %v687, %v687
  %v704 = vpack.c.bf16 %v688, %v688
  %v705 = vpack.c.bf16 %v689, %v689
  %v706 = vpack.c.bf16 %v690, %v690
  %v707 = vpack.c.bf16 %v691, %v691
  %v708 = vpack.c.bf16 %v692, %v692
  %v709 = vpack.c.bf16 %v693, %v693
  %v710 = vpack.c.bf16 %v694, %v694
  %v711 = vpack.c.bf16 %v695, %v695
  %v712 = vpack.c.bf16 %v696, %v696
  %v713 = vpack.c.bf16 %v697, %v697
  %714 = vst [vmem:[%s7] sm:$0xf] %v698
  %715 = vst [vmem:[%s7 + $0x4] sm:$0xf] %v699
  %716 = vst [vmem:[%s7 + $0x8] sm:$0xf] %v700
  %717 = vst [vmem:[%s7 + $0xc] sm:$0xf] %v701
  %718 = vst [vmem:[%s7 + $0x10] sm:$0xf] %v702
  %719 = vst [vmem:[%s7 + $0x14] sm:$0xf] %v703
  %720 = vst [vmem:[%s7 + $0x18] sm:$0xf] %v704
  %721 = vst [vmem:[%s7 + $0x1c] sm:$0xf] %v705
  %722 = vst [vmem:[%s7 + $0x20] sm:$0xf] %v706
  %723 = vst [vmem:[%s7 + $0x24] sm:$0xf] %v707
  %724 = vst [vmem:[%s7 + $0x28] sm:$0xf] %v708
  %725 = vst [vmem:[%s7 + $0x2c] sm:$0xf] %v709
  %726 = vst [vmem:[%s7 + $0x30] sm:$0xf] %v710
  %727 = vst [vmem:[%s7 + $0x34] sm:$0xf] %v711
  %728 = vst [vmem:[%s7 + $0x38] sm:$0xf] %v712
  %729 = vst [vmem:[%s7 + $0x3c] sm:$0xf] %v713
  // Predicated region
  $region30: #{gcn_model_forward.1} parent=0 // pred_check
    _
  $region31: #{gcn_model_forward.1} parent=0 // pred_check_branch
    %731 = sbr.rel (0) target = $region33
  $region32: #{gcn_model_forward.1} parent=0 // pred_region
    _
  $region33: #{gcn_model_forward.1} parent=0 // pred_fallthru
    _
  // Predicated region
  $region34: #{gcn_model_forward.1} parent=0 // pred_check
    _
  $region35: #{gcn_model_forward.1} parent=0 // pred_check_branch
    %733 = sbr.rel (0) target = $region37
  $region36: #{gcn_model_forward.1} parent=0 // pred_region
    _
  $region37: #{gcn_model_forward.1} parent=0 // pred_fallthru
    _

</llo_original>
